<compile_context>
chip_gen: v5e
topology: v5e:2x2
jax: 0.10.0
libtpu: 0.0.40
codegen_flags: <defaults>
</compile_context>

<pallas_src>
import functools

import jax
import jax.numpy as jnp
from jax import lax
from jax.experimental import pallas as pl
from jax.experimental.pallas import tpu as pltpu


# ---------------------------------------------------------------------------
# Fused kernel: qkv projection + per-head attention + output projection
# ---------------------------------------------------------------------------
def _fused_attention_kernel(x_ref, wqkv_ref, wproj_ref, bproj_ref, o_ref, *,
                            num_heads, mxu_dtype, approx_recip):
    N, C = x_ref.shape
    D = C // num_heads

    # --- qkv = x @ Wqkv  (scale already folded into the q columns) ----------
    x = x_ref[...].astype(mxu_dtype)
    w_qkv = wqkv_ref[...].astype(mxu_dtype)
    qkv = jnp.dot(x, w_qkv, preferred_element_type=jnp.float32)        # (N, 3C) f32

    # --- per-head attention; heads fully unrolled (H is small & static) -----
    head_outs = []
    for h in range(num_heads):
        q = qkv[:, h * D:(h + 1) * D]                 # (N, D), already *scale
        k = qkv[:, C + h * D:C + (h + 1) * D]         # (N, D)
        v = qkv[:, 2 * C + h * D:2 * C + (h + 1) * D]  # (N, D)

        # q @ k^T via dot_general contracting on D (no k transpose materialized)
        s = lax.dot_general(
            q.astype(mxu_dtype), k.astype(mxu_dtype),
            dimension_numbers=(((1,), (1,)), ((), ())),
            preferred_element_type=jnp.float32)                        # (N, N)

        # softmax kept in f32 on the VPU/EUP; normalization is deferred to the
        # (N, D) output (N*D multiplies instead of N*N).
        m = jnp.max(s, axis=-1, keepdims=True)
        p = jnp.exp(s - m)                                             # unnormalized
        denom = jnp.sum(p, axis=-1, keepdims=True)                     # (N, 1)

        o = jnp.dot(p.astype(mxu_dtype), v.astype(mxu_dtype),
                    preferred_element_type=jnp.float32)                # (N, D)
        o = o * pl.reciprocal(denom, approx=approx_recip)
        head_outs.append(o)

    # lane-dense (N, C) slab, matches x.transpose(0,1).reshape(N, C)
    attn = jnp.concatenate(head_outs, axis=1)                          # (N, C)

    # --- output projection: out = attn @ Wproj + b ---------------------------
    out = jnp.dot(attn.astype(mxu_dtype), wproj_ref[...].astype(mxu_dtype),
                  preferred_element_type=jnp.float32)
    o_ref[...] = (out + bproj_ref[...]).astype(o_ref.dtype)


# ---------------------------------------------------------------------------
# Wrapper
# ---------------------------------------------------------------------------
def kan_attention(x, w_qkv_torch, w_proj_torch, b_proj, num_heads, *,
                  mxu_dtype=jnp.float32):
    """KANAttention forward.

    x:             (N, C)
    w_qkv_torch:   (3C, C)  PyTorch Linear layout (out_features, in_features)
    w_proj_torch:  (C, C)
    b_proj:        (C,)
    mxu_dtype:     dtype fed to the MXU (jnp.bfloat16 recommended on v6e/v7x;
                   f32 keeps the strict-tolerance path).
    """
    N, C = x.shape
    assert C % num_heads == 0
    D = C // num_heads
    scale = D ** (-0.5)

    # (out, in) -> (in, out) so the kernel computes x @ W; fold head_dim**-0.5
    # into the q columns once (one-time host-side prep).
    w_qkv = jnp.transpose(w_qkv_torch)            # (C, 3C)
    w_qkv = w_qkv.at[:, :C].multiply(scale)
    w_proj = jnp.transpose(w_proj_torch)          # (C, C)
    b_proj2d = b_proj.reshape(1, C)               # broadcast row

    kernel = functools.partial(
        _fused_attention_kernel,
        num_heads=num_heads,
        mxu_dtype=mxu_dtype,
        approx_recip=(mxu_dtype != jnp.float32),
    )

    vmem_spec = pl.BlockSpec(memory_space=pltpu.MemorySpace.VMEM)
    return pl.pallas_call(
        kernel,
        in_specs=[vmem_spec, vmem_spec, vmem_spec, vmem_spec],
        out_specs=vmem_spec,
        out_shape=jax.ShapeDtypeStruct((N, C), x.dtype),
    )(x, w_qkv, w_proj, b_proj2d)


# ---------------------------------------------------------------------------
# Pure-JAX reference (mirrors the PyTorch forward)
# ---------------------------------------------------------------------------
def kan_attention_ref(x, w_qkv_torch, w_proj_torch, b_proj, num_heads):
    N, C = x.shape
    head_dim = C // num_heads
    scale = head_dim ** (-0.5)
    qkv = x @ w_qkv_torch.T
    qkv = qkv.reshape(N, 3, num_heads, head_dim).transpose(1, 2, 0, 3)
    q, k, v = qkv[0], qkv[1], qkv[2]
    s = (q * scale) @ jnp.swapaxes(k, -1, -2)
    p = jax.nn.softmax(s, axis=-1)
    o = p @ v
    o = o.transpose(1, 0, 2).reshape(N, C)
    return o @ w_proj_torch.T + b_proj


# ---------------------------------------------------------------------------
if __name__ == "__main__":
    # Small shapes consistent with forward(x: (N, C)): N tokens, C = dim.
    N, C, H = 16, 64, 8  # head_dim = 8

    key = jax.random.PRNGKey(0)
    kx, kq, kp, kb = jax.random.split(key, 4)

    x = jax.random.normal(kx, (N, C), jnp.float32)
    # Deterministic synthetic parameters (PyTorch Linear layout).
    w_qkv_torch = jax.random.normal(kq, (3 * C, C), jnp.float32) * 0.05   # qkv, bias=False
    w_proj_torch = jax.random.normal(kp, (C, C), jnp.float32) * 0.05      # proj weight
    b_proj = jax.random.normal(kb, (C,), jnp.float32) * 0.05              # proj bias

    ref = kan_attention_ref(x, w_qkv_torch, w_proj_torch, b_proj, H)

    # f32 MXU path: strict correctness check.
    out = kan_attention(x, w_qkv_torch, w_proj_torch, b_proj, H)
    out = jax.block_until_ready(out)
    assert out.shape == (N, C)
    assert jnp.allclose(out, ref, atol=1e-4, rtol=1e-4), (
        float(jnp.max(jnp.abs(out - ref)))
    )

    # bf16-to-MXU path (v6e/v7x recommendation); accumulation stays f32, so
    # only the expected bf16 input-rounding error shows up.
    out_bf16 = kan_attention(x, w_qkv_torch, w_proj_torch, b_proj, H,
                             mxu_dtype=jnp.bfloat16)
    out_bf16 = jax.block_until_ready(out_bf16)
    assert jnp.allclose(out_bf16, ref, atol=3e-2, rtol=3e-2), (
        float(jnp.max(jnp.abs(out_bf16 - ref)))
    )

    print("KERNEL_OK")
</pallas_src>

<mosaic_0001>
module attributes {stable_mosaic.version = 11 : i64} {
  func.func @_fused_attention_kernel(%arg0: memref<16x64xf32, #tpu.memory_space<vmem>>, %arg1: memref<64x192xf32, #tpu.memory_space<vmem>>, %arg2: memref<64x64xf32, #tpu.memory_space<vmem>>, %arg3: memref<1x64xf32, #tpu.memory_space<vmem>>, %arg4: memref<16x64xf32, #tpu.memory_space<vmem>>) attributes {dimension_semantics = [], scalar_prefetch = 0 : i64, scratch_operands = 0 : i64, tpu.core_type = #tpu.core_type<tc>} {
    %c0 = arith.constant 0 : index
    %c0_0 = arith.constant 0 : index
    %0 = vector.load %arg0[%c0, %c0_0] : memref<16x64xf32, #tpu.memory_space<vmem>>, vector<16x64xf32>
    %c0_1 = arith.constant 0 : index
    %c0_2 = arith.constant 0 : index
    %1 = vector.load %arg1[%c0_1, %c0_2] : memref<64x192xf32, #tpu.memory_space<vmem>>, vector<64x192xf32>
    %cst = arith.constant dense<0.000000e+00> : vector<16x192xf32>
    %2 = tpu.matmul %0, %1, %cst {dimension_numbers = #tpu.dot_dimension_numbers<[1], [0], [0], [1], [0, 0, 1, 1], [], []>} : vector<16x64xf32>, vector<64x192xf32>, vector<16x192xf32> -> vector<16x192xf32>
    %3 = vector.extract_strided_slice %2 {offsets = [0, 0], sizes = [16, 8], strides = [1, 1]} : vector<16x192xf32> to vector<16x8xf32>
    %4 = vector.extract_strided_slice %2 {offsets = [0, 64], sizes = [16, 8], strides = [1, 1]} : vector<16x192xf32> to vector<16x8xf32>
    %5 = vector.extract_strided_slice %2 {offsets = [0, 128], sizes = [16, 8], strides = [1, 1]} : vector<16x192xf32> to vector<16x8xf32>
    %cst_3 = arith.constant dense<0.000000e+00> : vector<16x16xf32>
    %6 = tpu.matmul %3, %4, %cst_3 {dimension_numbers = #tpu.dot_dimension_numbers<[1], [1], [0], [0], [0, 0, 1, 0], [], []>} : vector<16x8xf32>, vector<16x8xf32>, vector<16x16xf32> -> vector<16x16xf32>
    %cst_4 = arith.constant dense<0xFF800000> : vector<16xf32>
    %7 = vector.multi_reduction <maximumf>, %6, %cst_4 [1] : vector<16x16xf32> to vector<16xf32>
    %8 = vector.shape_cast %7 : vector<16xf32> to vector<16x1xf32>
    %9 = vector.broadcast %8 : vector<16x1xf32> to vector<16x16xf32>
    %10 = arith.subf %6, %9 : vector<16x16xf32>
    %11 = math.exp %10 : vector<16x16xf32>
    %cst_5 = arith.constant dense<0.000000e+00> : vector<16xf32>
    %12 = vector.multi_reduction <add>, %11, %cst_5 [1] : vector<16x16xf32> to vector<16xf32>
    %13 = vector.shape_cast %12 : vector<16xf32> to vector<16x1xf32>
    %cst_6 = arith.constant dense<0.000000e+00> : vector<16x8xf32>
    %14 = tpu.matmul %11, %5, %cst_6 {dimension_numbers = #tpu.dot_dimension_numbers<[1], [0], [0], [1], [0, 0, 1, 1], [], []>} : vector<16x16xf32>, vector<16x8xf32>, vector<16x8xf32> -> vector<16x8xf32>
    %15 = tpu.reciprocal %13 : vector<16x1xf32> -> vector<16x1xf32>
    %16 = vector.broadcast %15 : vector<16x1xf32> to vector<16x8xf32>
    %17 = arith.mulf %14, %16 : vector<16x8xf32>
    %18 = vector.extract_strided_slice %2 {offsets = [0, 8], sizes = [16, 8], strides = [1, 1]} : vector<16x192xf32> to vector<16x8xf32>
    %19 = vector.extract_strided_slice %2 {offsets = [0, 72], sizes = [16, 8], strides = [1, 1]} : vector<16x192xf32> to vector<16x8xf32>
    %20 = vector.extract_strided_slice %2 {offsets = [0, 136], sizes = [16, 8], strides = [1, 1]} : vector<16x192xf32> to vector<16x8xf32>
    %cst_7 = arith.constant dense<0.000000e+00> : vector<16x16xf32>
    %21 = tpu.matmul %18, %19, %cst_7 {dimension_numbers = #tpu.dot_dimension_numbers<[1], [1], [0], [0], [0, 0, 1, 0], [], []>} : vector<16x8xf32>, vector<16x8xf32>, vector<16x16xf32> -> vector<16x16xf32>
    %cst_8 = arith.constant dense<0xFF800000> : vector<16xf32>
    %22 = vector.multi_reduction <maximumf>, %21, %cst_8 [1] : vector<16x16xf32> to vector<16xf32>
    %23 = vector.shape_cast %22 : vector<16xf32> to vector<16x1xf32>
    %24 = vector.broadcast %23 : vector<16x1xf32> to vector<16x16xf32>
    %25 = arith.subf %21, %24 : vector<16x16xf32>
    %26 = math.exp %25 : vector<16x16xf32>
    %cst_9 = arith.constant dense<0.000000e+00> : vector<16xf32>
    %27 = vector.multi_reduction <add>, %26, %cst_9 [1] : vector<16x16xf32> to vector<16xf32>
    %28 = vector.shape_cast %27 : vector<16xf32> to vector<16x1xf32>
    %cst_10 = arith.constant dense<0.000000e+00> : vector<16x8xf32>
    %29 = tpu.matmul %26, %20, %cst_10 {dimension_numbers = #tpu.dot_dimension_numbers<[1], [0], [0], [1], [0, 0, 1, 1], [], []>} : vector<16x16xf32>, vector<16x8xf32>, vector<16x8xf32> -> vector<16x8xf32>
    %30 = tpu.reciprocal %28 : vector<16x1xf32> -> vector<16x1xf32>
    %31 = vector.broadcast %30 : vector<16x1xf32> to vector<16x8xf32>
    %32 = arith.mulf %29, %31 : vector<16x8xf32>
    %33 = vector.extract_strided_slice %2 {offsets = [0, 16], sizes = [16, 8], strides = [1, 1]} : vector<16x192xf32> to vector<16x8xf32>
    %34 = vector.extract_strided_slice %2 {offsets = [0, 80], sizes = [16, 8], strides = [1, 1]} : vector<16x192xf32> to vector<16x8xf32>
    %35 = vector.extract_strided_slice %2 {offsets = [0, 144], sizes = [16, 8], strides = [1, 1]} : vector<16x192xf32> to vector<16x8xf32>
    %cst_11 = arith.constant dense<0.000000e+00> : vector<16x16xf32>
    %36 = tpu.matmul %33, %34, %cst_11 {dimension_numbers = #tpu.dot_dimension_numbers<[1], [1], [0], [0], [0, 0, 1, 0], [], []>} : vector<16x8xf32>, vector<16x8xf32>, vector<16x16xf32> -> vector<16x16xf32>
    %cst_12 = arith.constant dense<0xFF800000> : vector<16xf32>
    %37 = vector.multi_reduction <maximumf>, %36, %cst_12 [1] : vector<16x16xf32> to vector<16xf32>
    %38 = vector.shape_cast %37 : vector<16xf32> to vector<16x1xf32>
    %39 = vector.broadcast %38 : vector<16x1xf32> to vector<16x16xf32>
    %40 = arith.subf %36, %39 : vector<16x16xf32>
    %41 = math.exp %40 : vector<16x16xf32>
    %cst_13 = arith.constant dense<0.000000e+00> : vector<16xf32>
    %42 = vector.multi_reduction <add>, %41, %cst_13 [1] : vector<16x16xf32> to vector<16xf32>
    %43 = vector.shape_cast %42 : vector<16xf32> to vector<16x1xf32>
    %cst_14 = arith.constant dense<0.000000e+00> : vector<16x8xf32>
    %44 = tpu.matmul %41, %35, %cst_14 {dimension_numbers = #tpu.dot_dimension_numbers<[1], [0], [0], [1], [0, 0, 1, 1], [], []>} : vector<16x16xf32>, vector<16x8xf32>, vector<16x8xf32> -> vector<16x8xf32>
    %45 = tpu.reciprocal %43 : vector<16x1xf32> -> vector<16x1xf32>
    %46 = vector.broadcast %45 : vector<16x1xf32> to vector<16x8xf32>
    %47 = arith.mulf %44, %46 : vector<16x8xf32>
    %48 = vector.extract_strided_slice %2 {offsets = [0, 24], sizes = [16, 8], strides = [1, 1]} : vector<16x192xf32> to vector<16x8xf32>
    %49 = vector.extract_strided_slice %2 {offsets = [0, 88], sizes = [16, 8], strides = [1, 1]} : vector<16x192xf32> to vector<16x8xf32>
    %50 = vector.extract_strided_slice %2 {offsets = [0, 152], sizes = [16, 8], strides = [1, 1]} : vector<16x192xf32> to vector<16x8xf32>
    %cst_15 = arith.constant dense<0.000000e+00> : vector<16x16xf32>
    %51 = tpu.matmul %48, %49, %cst_15 {dimension_numbers = #tpu.dot_dimension_numbers<[1], [1], [0], [0], [0, 0, 1, 0], [], []>} : vector<16x8xf32>, vector<16x8xf32>, vector<16x16xf32> -> vector<16x16xf32>
    %cst_16 = arith.constant dense<0xFF800000> : vector<16xf32>
    %52 = vector.multi_reduction <maximumf>, %51, %cst_16 [1] : vector<16x16xf32> to vector<16xf32>
    %53 = vector.shape_cast %52 : vector<16xf32> to vector<16x1xf32>
    %54 = vector.broadcast %53 : vector<16x1xf32> to vector<16x16xf32>
    %55 = arith.subf %51, %54 : vector<16x16xf32>
    %56 = math.exp %55 : vector<16x16xf32>
    %cst_17 = arith.constant dense<0.000000e+00> : vector<16xf32>
    %57 = vector.multi_reduction <add>, %56, %cst_17 [1] : vector<16x16xf32> to vector<16xf32>
    %58 = vector.shape_cast %57 : vector<16xf32> to vector<16x1xf32>
    %cst_18 = arith.constant dense<0.000000e+00> : vector<16x8xf32>
    %59 = tpu.matmul %56, %50, %cst_18 {dimension_numbers = #tpu.dot_dimension_numbers<[1], [0], [0], [1], [0, 0, 1, 1], [], []>} : vector<16x16xf32>, vector<16x8xf32>, vector<16x8xf32> -> vector<16x8xf32>
    %60 = tpu.reciprocal %58 : vector<16x1xf32> -> vector<16x1xf32>
    %61 = vector.broadcast %60 : vector<16x1xf32> to vector<16x8xf32>
    %62 = arith.mulf %59, %61 : vector<16x8xf32>
    %63 = vector.extract_strided_slice %2 {offsets = [0, 32], sizes = [16, 8], strides = [1, 1]} : vector<16x192xf32> to vector<16x8xf32>
    %64 = vector.extract_strided_slice %2 {offsets = [0, 96], sizes = [16, 8], strides = [1, 1]} : vector<16x192xf32> to vector<16x8xf32>
    %65 = vector.extract_strided_slice %2 {offsets = [0, 160], sizes = [16, 8], strides = [1, 1]} : vector<16x192xf32> to vector<16x8xf32>
    %cst_19 = arith.constant dense<0.000000e+00> : vector<16x16xf32>
    %66 = tpu.matmul %63, %64, %cst_19 {dimension_numbers = #tpu.dot_dimension_numbers<[1], [1], [0], [0], [0, 0, 1, 0], [], []>} : vector<16x8xf32>, vector<16x8xf32>, vector<16x16xf32> -> vector<16x16xf32>
    %cst_20 = arith.constant dense<0xFF800000> : vector<16xf32>
    %67 = vector.multi_reduction <maximumf>, %66, %cst_20 [1] : vector<16x16xf32> to vector<16xf32>
    %68 = vector.shape_cast %67 : vector<16xf32> to vector<16x1xf32>
    %69 = vector.broadcast %68 : vector<16x1xf32> to vector<16x16xf32>
    %70 = arith.subf %66, %69 : vector<16x16xf32>
    %71 = math.exp %70 : vector<16x16xf32>
    %cst_21 = arith.constant dense<0.000000e+00> : vector<16xf32>
    %72 = vector.multi_reduction <add>, %71, %cst_21 [1] : vector<16x16xf32> to vector<16xf32>
    %73 = vector.shape_cast %72 : vector<16xf32> to vector<16x1xf32>
    %cst_22 = arith.constant dense<0.000000e+00> : vector<16x8xf32>
    %74 = tpu.matmul %71, %65, %cst_22 {dimension_numbers = #tpu.dot_dimension_numbers<[1], [0], [0], [1], [0, 0, 1, 1], [], []>} : vector<16x16xf32>, vector<16x8xf32>, vector<16x8xf32> -> vector<16x8xf32>
    %75 = tpu.reciprocal %73 : vector<16x1xf32> -> vector<16x1xf32>
    %76 = vector.broadcast %75 : vector<16x1xf32> to vector<16x8xf32>
    %77 = arith.mulf %74, %76 : vector<16x8xf32>
    %78 = vector.extract_strided_slice %2 {offsets = [0, 40], sizes = [16, 8], strides = [1, 1]} : vector<16x192xf32> to vector<16x8xf32>
    %79 = vector.extract_strided_slice %2 {offsets = [0, 104], sizes = [16, 8], strides = [1, 1]} : vector<16x192xf32> to vector<16x8xf32>
    %80 = vector.extract_strided_slice %2 {offsets = [0, 168], sizes = [16, 8], strides = [1, 1]} : vector<16x192xf32> to vector<16x8xf32>
    %cst_23 = arith.constant dense<0.000000e+00> : vector<16x16xf32>
    %81 = tpu.matmul %78, %79, %cst_23 {dimension_numbers = #tpu.dot_dimension_numbers<[1], [1], [0], [0], [0, 0, 1, 0], [], []>} : vector<16x8xf32>, vector<16x8xf32>, vector<16x16xf32> -> vector<16x16xf32>
    %cst_24 = arith.constant dense<0xFF800000> : vector<16xf32>
    %82 = vector.multi_reduction <maximumf>, %81, %cst_24 [1] : vector<16x16xf32> to vector<16xf32>
    %83 = vector.shape_cast %82 : vector<16xf32> to vector<16x1xf32>
    %84 = vector.broadcast %83 : vector<16x1xf32> to vector<16x16xf32>
    %85 = arith.subf %81, %84 : vector<16x16xf32>
    %86 = math.exp %85 : vector<16x16xf32>
    %cst_25 = arith.constant dense<0.000000e+00> : vector<16xf32>
    %87 = vector.multi_reduction <add>, %86, %cst_25 [1] : vector<16x16xf32> to vector<16xf32>
    %88 = vector.shape_cast %87 : vector<16xf32> to vector<16x1xf32>
    %cst_26 = arith.constant dense<0.000000e+00> : vector<16x8xf32>
    %89 = tpu.matmul %86, %80, %cst_26 {dimension_numbers = #tpu.dot_dimension_numbers<[1], [0], [0], [1], [0, 0, 1, 1], [], []>} : vector<16x16xf32>, vector<16x8xf32>, vector<16x8xf32> -> vector<16x8xf32>
    %90 = tpu.reciprocal %88 : vector<16x1xf32> -> vector<16x1xf32>
    %91 = vector.broadcast %90 : vector<16x1xf32> to vector<16x8xf32>
    %92 = arith.mulf %89, %91 : vector<16x8xf32>
    %93 = vector.extract_strided_slice %2 {offsets = [0, 48], sizes = [16, 8], strides = [1, 1]} : vector<16x192xf32> to vector<16x8xf32>
    %94 = vector.extract_strided_slice %2 {offsets = [0, 112], sizes = [16, 8], strides = [1, 1]} : vector<16x192xf32> to vector<16x8xf32>
    %95 = vector.extract_strided_slice %2 {offsets = [0, 176], sizes = [16, 8], strides = [1, 1]} : vector<16x192xf32> to vector<16x8xf32>
    %cst_27 = arith.constant dense<0.000000e+00> : vector<16x16xf32>
    %96 = tpu.matmul %93, %94, %cst_27 {dimension_numbers = #tpu.dot_dimension_numbers<[1], [1], [0], [0], [0, 0, 1, 0], [], []>} : vector<16x8xf32>, vector<16x8xf32>, vector<16x16xf32> -> vector<16x16xf32>
    %cst_28 = arith.constant dense<0xFF800000> : vector<16xf32>
    %97 = vector.multi_reduction <maximumf>, %96, %cst_28 [1] : vector<16x16xf32> to vector<16xf32>
    %98 = vector.shape_cast %97 : vector<16xf32> to vector<16x1xf32>
    %99 = vector.broadcast %98 : vector<16x1xf32> to vector<16x16xf32>
    %100 = arith.subf %96, %99 : vector<16x16xf32>
    %101 = math.exp %100 : vector<16x16xf32>
    %cst_29 = arith.constant dense<0.000000e+00> : vector<16xf32>
    %102 = vector.multi_reduction <add>, %101, %cst_29 [1] : vector<16x16xf32> to vector<16xf32>
    %103 = vector.shape_cast %102 : vector<16xf32> to vector<16x1xf32>
    %cst_30 = arith.constant dense<0.000000e+00> : vector<16x8xf32>
    %104 = tpu.matmul %101, %95, %cst_30 {dimension_numbers = #tpu.dot_dimension_numbers<[1], [0], [0], [1], [0, 0, 1, 1], [], []>} : vector<16x16xf32>, vector<16x8xf32>, vector<16x8xf32> -> vector<16x8xf32>
    %105 = tpu.reciprocal %103 : vector<16x1xf32> -> vector<16x1xf32>
    %106 = vector.broadcast %105 : vector<16x1xf32> to vector<16x8xf32>
    %107 = arith.mulf %104, %106 : vector<16x8xf32>
    %108 = vector.extract_strided_slice %2 {offsets = [0, 56], sizes = [16, 8], strides = [1, 1]} : vector<16x192xf32> to vector<16x8xf32>
    %109 = vector.extract_strided_slice %2 {offsets = [0, 120], sizes = [16, 8], strides = [1, 1]} : vector<16x192xf32> to vector<16x8xf32>
    %110 = vector.extract_strided_slice %2 {offsets = [0, 184], sizes = [16, 8], strides = [1, 1]} : vector<16x192xf32> to vector<16x8xf32>
    %cst_31 = arith.constant dense<0.000000e+00> : vector<16x16xf32>
    %111 = tpu.matmul %108, %109, %cst_31 {dimension_numbers = #tpu.dot_dimension_numbers<[1], [1], [0], [0], [0, 0, 1, 0], [], []>} : vector<16x8xf32>, vector<16x8xf32>, vector<16x16xf32> -> vector<16x16xf32>
    %cst_32 = arith.constant dense<0xFF800000> : vector<16xf32>
    %112 = vector.multi_reduction <maximumf>, %111, %cst_32 [1] : vector<16x16xf32> to vector<16xf32>
    %113 = vector.shape_cast %112 : vector<16xf32> to vector<16x1xf32>
    %114 = vector.broadcast %113 : vector<16x1xf32> to vector<16x16xf32>
    %115 = arith.subf %111, %114 : vector<16x16xf32>
    %116 = math.exp %115 : vector<16x16xf32>
    %cst_33 = arith.constant dense<0.000000e+00> : vector<16xf32>
    %117 = vector.multi_reduction <add>, %116, %cst_33 [1] : vector<16x16xf32> to vector<16xf32>
    %118 = vector.shape_cast %117 : vector<16xf32> to vector<16x1xf32>
    %cst_34 = arith.constant dense<0.000000e+00> : vector<16x8xf32>
    %119 = tpu.matmul %116, %110, %cst_34 {dimension_numbers = #tpu.dot_dimension_numbers<[1], [0], [0], [1], [0, 0, 1, 1], [], []>} : vector<16x16xf32>, vector<16x8xf32>, vector<16x8xf32> -> vector<16x8xf32>
    %120 = tpu.reciprocal %118 : vector<16x1xf32> -> vector<16x1xf32>
    %121 = vector.broadcast %120 : vector<16x1xf32> to vector<16x8xf32>
    %122 = arith.mulf %119, %121 : vector<16x8xf32>
    %123 = tpu.concatenate %17, %32, %47, %62, %77, %92, %107, %122 in 1 : vector<16x8xf32>, vector<16x8xf32>, vector<16x8xf32>, vector<16x8xf32>, vector<16x8xf32>, vector<16x8xf32>, vector<16x8xf32>, vector<16x8xf32> -> vector<16x64xf32>
    %c0_35 = arith.constant 0 : index
    %c0_36 = arith.constant 0 : index
    %124 = vector.load %arg2[%c0_35, %c0_36] : memref<64x64xf32, #tpu.memory_space<vmem>>, vector<64x64xf32>
    %cst_37 = arith.constant dense<0.000000e+00> : vector<16x64xf32>
    %125 = tpu.matmul %123, %124, %cst_37 {dimension_numbers = #tpu.dot_dimension_numbers<[1], [0], [0], [1], [0, 0, 1, 1], [], []>} : vector<16x64xf32>, vector<64x64xf32>, vector<16x64xf32> -> vector<16x64xf32>
    %c0_38 = arith.constant 0 : index
    %c0_39 = arith.constant 0 : index
    %126 = vector.load %arg3[%c0_38, %c0_39] : memref<1x64xf32, #tpu.memory_space<vmem>>, vector<1x64xf32>
    %127 = vector.broadcast %126 : vector<1x64xf32> to vector<16x64xf32>
    %128 = arith.addf %125, %127 : vector<16x64xf32>
    %c0_40 = arith.constant 0 : index
    %c0_41 = arith.constant 0 : index
    %129 = vector.load %arg4[%c0_40, %c0_41] : memref<16x64xf32, #tpu.memory_space<vmem>>, vector<16x64xf32>
    tpu.vector_store %arg4[%c0_40, %c0_41], %128 {strides = array<i32>} : memref<16x64xf32, #tpu.memory_space<vmem>>, vector<16x64xf32>,
    return
  }
}

</mosaic_0001>

<llo_original>
// kernel: tpu_custom_call.1
$region0: #{tpu_custom_call.1}
  #allocation0 [shape = 'u32[]', space=smem, size = 0x4, offset = 0x4, fixed_abs, tag = 'smem constant byte address 0x4 - core index']
  #allocation1 [shape = 'u32[72,128]{1,0:T(1,128)}', space=vmem, size = 0x9000, scoped, tag = 'internal scratch']
  %s0 = inlined_call_operand.hbm [shape: f32[16,64], index: 0, kind: input, shape index: {}]
  %s1 = inlined_call_operand.hbm [shape: f32[64,192], index: 1, kind: input, shape index: {}]
  %s2 = inlined_call_operand.hbm [shape: f32[64,64], index: 2, kind: input, shape index: {}]
  %s3 = inlined_call_operand.vmem [shape: f32[1,64], index: 3, kind: input, shape index: {}]
  %s4 = inlined_call_operand.hbm [shape: f32[16,64], index: 4, kind: output, shape index: {}]
  %s5 = sld [smem:[#allocation0]]
  $region38: #{tpu_custom_call.1} parent=0
    _
  %s7 = ssub.s32 1, %s5
  %s8 = scalar_select 0, %s7, %s5
  $region1: #{tpu_custom_call.1} parent=0
    #allocation2 [shape = 'u8[8192]{0}', space=vmem, size = 0x2000, scoped, tag = 'input window, operand 0, single buffered']
    #allocation3 [shape = 's32[1]{0}', space=sflag, size = 0x4, scoped, tag = 'scoped memory for tpu_custom_call.1']
    #allocation4 [shape = 's32[1]{0}', space=sflag, size = 0x4, scoped, tag = 'scoped memory for tpu_custom_call.1']
    #allocation5 [shape = 'u8[65536]{0}', space=vmem, size = 0x10000, scoped, tag = 'input window, operand 1, single buffered']
    #allocation6 [shape = 's32[1]{0}', space=sflag, size = 0x4, scoped, tag = 'scoped memory for tpu_custom_call.1']
    #allocation7 [shape = 'u8[32768]{0}', space=vmem, size = 0x8000, scoped, tag = 'input window, operand 2, single buffered']
    #allocation8 [shape = 'u8[8192]{0}', space=vmem, size = 0x2000, scoped, tag = 'output window, operand 0, single buffered']
    %9 = vsyncpa [#allocation3], 0
    %10 = vsyncpa [#allocation6], 0
    %11 = vsyncpa [#allocation4], 0
    // Predicated region
    $region2: #{tpu_custom_call.1} parent=1 // pred_check
      _
    $region3: #{tpu_custom_call.1} parent=1 // pred_check_branch
      %13 = sbr.rel (0) target = $region5
    $region4: #{tpu_custom_call.1} parent=1 // pred_region
      %15 = vsyncadd [#allocation3], 0
      %s16 = sshll.u32 %s0, 4
      %s17 = int_to_ptr.hbm [resolvable:$true] %s16
      %s18 = sshll.u32 [#allocation2], 4
      %s19 = int_to_ptr.vmem [resolvable:$true] %s18
      %24 = dma.hbm_to_vmem [thread:$0]  %s17, 256, %s19, [#allocation3], 128, 128, 8
    $region5: #{tpu_custom_call.1} parent=1 // pred_fallthru
      _
    // Predicated region
    $region6: #{tpu_custom_call.1} parent=1 // pred_check
      _
    $region7: #{tpu_custom_call.1} parent=1 // pred_check_branch
      %26 = sbr.rel (0) target = $region9
    $region8: #{tpu_custom_call.1} parent=1 // pred_region
      %28 = vsyncadd [#allocation6], 0
      %s29 = sshll.u32 %s1, 4
      %s30 = int_to_ptr.hbm [resolvable:$true] %s29
      %s31 = sshll.u32 [#allocation5], 4
      %s32 = int_to_ptr.vmem [resolvable:$true] %s31
      %37 = dma.hbm_to_vmem [thread:$0]  %s30, 2048, %s32, [#allocation6], 256, 256, 16
    $region9: #{tpu_custom_call.1} parent=1 // pred_fallthru
      _
    // Predicated region
    $region10: #{tpu_custom_call.1} parent=1 // pred_check
      _
    $region11: #{tpu_custom_call.1} parent=1 // pred_check_branch
      %39 = sbr.rel (0) target = $region13
    $region12: #{tpu_custom_call.1} parent=1 // pred_region
      %41 = vsyncadd [#allocation6], 0
      %s42 = sshll.u32 %s2, 4
      %s43 = int_to_ptr.hbm [resolvable:$true] %s42
      %s44 = sshll.u32 [#allocation7], 4
      %s45 = int_to_ptr.vmem [resolvable:$true] %s44
      %50 = dma.hbm_to_vmem [thread:$0]  %s43, 1024, %s45, [#allocation6], 128, 128, 8
    $region13: #{tpu_custom_call.1} parent=1 // pred_fallthru
      _
    // Predicated region
    $region14: #{tpu_custom_call.1} parent=1 // pred_check
      _
    $region15: #{tpu_custom_call.1} parent=1 // pred_check_branch
      %52 = sbr.rel (0) target = $region17
    $region16: #{tpu_custom_call.1} parent=1 // pred_region
      _
    $region17: #{tpu_custom_call.1} parent=1 // pred_fallthru
      _
    // Predicated region
    $region18: #{tpu_custom_call.1} parent=1 // pred_check
      _
    $region19: #{tpu_custom_call.1} parent=1 // pred_check_branch
      %54 = sbr.rel (0) target = $region21
    $region20: #{tpu_custom_call.1} parent=1 // pred_region
      %56 = dma.done [#allocation3], 256
    $region21: #{tpu_custom_call.1} parent=1 // pred_fallthru
      _
    // Predicated region
    $region22: #{tpu_custom_call.1} parent=1 // pred_check
      _
    $region23: #{tpu_custom_call.1} parent=1 // pred_check_branch
      %58 = sbr.rel (0) target = $region25
    $region24: #{tpu_custom_call.1} parent=1 // pred_region
      %60 = dma.done [#allocation6], 2048
    $region25: #{tpu_custom_call.1} parent=1 // pred_fallthru
      _
    // Predicated region
    $region26: #{tpu_custom_call.1} parent=1 // pred_check
      _
    $region27: #{tpu_custom_call.1} parent=1 // pred_check_branch
      %62 = sbr.rel (0) target = $region29
    $region28: #{tpu_custom_call.1} parent=1 // pred_region
      %64 = dma.done [#allocation6], 1024
    $region29: #{tpu_custom_call.1} parent=1 // pred_fallthru
      _
    %v65 = vld [vmem:[#allocation2] sm:$0xff]
    %v66 = vld [vmem:[#allocation2 + $0x8] sm:$0xff]
    %v67 = vld [vmem:[#allocation5] sm:$0xff]
    %v68 = vld [vmem:[#allocation5 + $0x8] sm:$0xff]
    %v69 = vld [vmem:[#allocation5 + $0x10] sm:$0xff]
    %v70 = vld [vmem:[#allocation5 + $0x18] sm:$0xff]
    %v71 = vld [vmem:[#allocation5 + $0x20] sm:$0xff]
    %v72 = vld [vmem:[#allocation5 + $0x28] sm:$0xff]
    %v73 = vld [vmem:[#allocation5 + $0x30] sm:$0xff]
    %v74 = vld [vmem:[#allocation5 + $0x38] sm:$0xff]
    %v75 = vld [vmem:[#allocation5 + $0x40] sm:$0xff]
    %v76 = vld [vmem:[#allocation5 + $0x48] sm:$0xff]
    %v77 = vld [vmem:[#allocation5 + $0x50] sm:$0xff]
    %v78 = vld [vmem:[#allocation5 + $0x58] sm:$0xff]
    %v79 = vld [vmem:[#allocation5 + $0x60] sm:$0xff]
    %v80 = vld [vmem:[#allocation5 + $0x68] sm:$0xff]
    %v81 = vld [vmem:[#allocation5 + $0x70] sm:$0xff]
    %v82 = vld [vmem:[#allocation5 + $0x78] sm:$0xff]
    %vm83 = vcmask 523264
    %v85 = vsel %vm83, %v65, 0
    %v88 = vsel %vm83, %v66, 0
    %90 = vmatpush.msra.mxu0 0.0
    %91 = vmatpush.msra.mxu0 0.0
    %92 = vmatpush.msra.mxu0 0.0
    %93 = vmatpush.msra.mxu0 0.0
    %94 = vmatpush.msra.mxu0 0.0
    %95 = vmatpush.msra.mxu0 0.0
    %96 = vmatpush.msra.mxu0 0.0
    %97 = vmatpush.msra.mxu0 0.0
    %98 = vmatpush.msra.mxu0 %v81
    %99 = vmatpush.msra.mxu0 %v79
    %100 = vmatpush.msra.mxu0 %v77
    %101 = vmatpush.msra.mxu0 %v75
    %102 = vmatpush.msra.mxu0 %v73
    %103 = vmatpush.msra.mxu0 %v71
    %104 = vmatpush.msra.mxu0 %v69
    %105 = vmatpush.msra.mxu0 %v67
    %106 = vmatmul.f32.gmra.mxu0 %v85
    %v107 = vpop.f32.mrf.mxu0
    %v108 = vadd.f32 0.0, %v107
    %109 = vmatmul.f32.gmra.mxu0 %v88
    %v110 = vpop.f32.mrf.mxu0
    %v111 = vadd.f32 0.0, %v110
    %112 = vdwg.mxu0
    %113 = vmatpush.msra.mxu0 0.0
    %114 = vmatpush.msra.mxu0 0.0
    %115 = vmatpush.msra.mxu0 0.0
    %116 = vmatpush.msra.mxu0 0.0
    %117 = vmatpush.msra.mxu0 0.0
    %118 = vmatpush.msra.mxu0 0.0
    %119 = vmatpush.msra.mxu0 0.0
    %120 = vmatpush.msra.mxu0 0.0
    %121 = vmatpush.msra.mxu0 %v82
    %122 = vmatpush.msra.mxu0 %v80
    %123 = vmatpush.msra.mxu0 %v78
    %124 = vmatpush.msra.mxu0 %v76
    %125 = vmatpush.msra.mxu0 %v74
    %126 = vmatpush.msra.mxu0 %v72
    %127 = vmatpush.msra.mxu0 %v70
    %128 = vmatpush.msra.mxu0 %v68
    %129 = vmatmul.f32.gmra.mxu0 %v85
    %v130 = vpop.f32.mrf.mxu0
    %v131 = vadd.f32 0.0, %v130
    %132 = vmatmul.f32.gmra.mxu0 %v88
    %v133 = vpop.f32.mrf.mxu0
    %v134 = vadd.f32 0.0, %v133
    %135 = vdwg.mxu0
    %138 = vrot.lane.b32.xlu0 %v108, 64
    %v139 = vpop.permute.xlu0 %138
    %140 = vrot.lane.b32.xlu0 %v111, 64
    %v141 = vpop.permute.xlu0 %140
    %vm142 = vcmask 64512
    %v143 = vsel %vm142, %v108, 0
    %v145 = vsel %vm142, %v111, 0
    %v147 = vsel %vm142, %v139, 0
    %v149 = vsel %vm142, %v141, 0
    %151 = vmatpush.xpose.msra.mxu0 0.0
    %152 = vmatpush.xpose.msra.mxu0 0.0
    %153 = vmatpush.xpose.msra.mxu0 0.0
    %154 = vmatpush.xpose.msra.mxu0 0.0
    %155 = vmatpush.xpose.msra.mxu0 0.0
    %156 = vmatpush.xpose.msra.mxu0 0.0
    %157 = vmatpush.xpose.msra.mxu0 0.0
    %158 = vmatpush.xpose.msra.mxu0 0.0
    %159 = vmatpush.xpose.msra.mxu0 0.0
    %160 = vmatpush.xpose.msra.mxu0 0.0
    %161 = vmatpush.xpose.msra.mxu0 0.0
    %162 = vmatpush.xpose.msra.mxu0 0.0
    %163 = vmatpush.xpose.msra.mxu0 0.0
    %164 = vmatpush.xpose.msra.mxu0 0.0
    %165 = vmatpush.xpose.msra.mxu0 %v149
    %166 = vmatpush.xpose.msra.mxu0 %v147
    %167 = vmatmul.f32.gmra.mxu0 %v143
    %v168 = vpop.f32.mrf.mxu0
    %v169 = vadd.f32 0.0, %v168
    %170 = vmatmul.f32.gmra.mxu0 %v145
    %v171 = vpop.f32.mrf.mxu0
    %v172 = vadd.f32 0.0, %v171
    %173 = vdwg.mxu0
    %vm174 = vcmask 130048
    %v175 = vsel %vm174, %v169, -inf
    %176 = vmax.xlane.f32.xlu0 %v175
    %v177 = vpop.xlane.xlu0 %176
    %v178 = vsel %vm174, %v172, -inf
    %179 = vmax.xlane.f32.xlu0 %v178
    %v180 = vpop.xlane.xlu0 %179
    %v181 = vsub.f32 %v169, %v177
    %v182 = vsub.f32 %v172, %v180
    %v183 = vmul.f32 %v181, 1.442695
    %v184 = vpow.pop %v183
    %v185 = vmul.f32 %v182, 1.442695
    %v186 = vpow.pop %v185
    %v187 = vsel %vm174, %v184, 0.0
    %188 = vadd.xlane.f32.xlu0 %v187
    %v189 = vpop.xlane.xlu0 %188
    %v190 = vsel %vm174, %v186, 0.0
    %191 = vadd.xlane.f32.xlu0 %v190
    %v192 = vpop.xlane.xlu0 %191
    %v194 = vsel %vm174, %v184, 0
    %v197 = vsel %vm174, %v186, 0
    %199 = vmatpush.msra.mxu0 0.0
    %200 = vmatpush.msra.mxu0 0.0
    %201 = vmatpush.msra.mxu0 0.0
    %202 = vmatpush.msra.mxu0 0.0
    %203 = vmatpush.msra.mxu0 0.0
    %204 = vmatpush.msra.mxu0 0.0
    %205 = vmatpush.msra.mxu0 0.0
    %206 = vmatpush.msra.mxu0 0.0
    %207 = vmatpush.msra.mxu0 0.0
    %208 = vmatpush.msra.mxu0 0.0
    %209 = vmatpush.msra.mxu0 0.0
    %210 = vmatpush.msra.mxu0 0.0
    %211 = vmatpush.msra.mxu0 0.0
    %212 = vmatpush.msra.mxu0 0.0
    %213 = vmatpush.msra.mxu0 %v134
    %214 = vmatpush.msra.mxu0 %v131
    %215 = vmatmul.f32.gmra.mxu0 %v194
    %v216 = vpop.f32.mrf.mxu0
    %v217 = vadd.f32 0.0, %v216
    %218 = vmatmul.f32.gmra.mxu0 %v197
    %v219 = vpop.f32.mrf.mxu0
    %v220 = vadd.f32 0.0, %v219
    %221 = vdwg.mxu0
    %v222 = vrcp.pop %v189
    %v223 = vmul.f32 %v189, %v222
    %v224 = vsub.f32 1.0, %v223
    %v225 = vmul.f32 %v222, %v224
    %v226 = vadd.f32 %v222, %v225
    %vm227 = vweird.f32 %v189
    %vm228 = vweird.f32 %v222
    %vm229 = vmor %vm227, %vm228
    %v230 = vsel %vm229, %v222, %v226
    %v231 = vand.u32 2147483647, %v189
    %vm232 = vcmp.eq.f32.partialorder %v231, 8.507059e+37
    %v233 = vand.u32 %v189, 2147483648
    %v234 = vor.u32 1.1754944e-38, %v233
    %v235 = vsel %vm232, %v234, %v230
    %v236 = vrcp.pop %v192
    %v237 = vmul.f32 %v192, %v236
    %v238 = vsub.f32 1.0, %v237
    %v239 = vmul.f32 %v236, %v238
    %v240 = vadd.f32 %v236, %v239
    %vm241 = vweird.f32 %v192
    %vm242 = vweird.f32 %v236
    %vm243 = vmor %vm241, %vm242
    %v244 = vsel %vm243, %v236, %v240
    %v245 = vand.u32 2147483647, %v192
    %vm246 = vcmp.eq.f32.partialorder %v245, 8.507059e+37
    %v247 = vand.u32 %v192, 2147483648
    %v248 = vor.u32 1.1754944e-38, %v247
    %v249 = vsel %vm246, %v248, %v244
    %v250 = vmul.f32 %v217, %v235
    %v251 = vmul.f32 %v220, %v249
    %252 = vrot.lane.b32.xlu0 %v108, 120
    %v253 = vpop.permute.xlu0 %252
    %254 = vrot.lane.b32.xlu0 %v111, 120
    %v255 = vpop.permute.xlu0 %254
    %256 = vrot.lane.b32.xlu0 %v108, 56
    %v257 = vpop.permute.xlu0 %256
    %258 = vrot.lane.b32.xlu0 %v111, 56
    %v259 = vpop.permute.xlu0 %258
    %v260 = vsel %vm142, %v253, 0
    %v262 = vsel %vm142, %v255, 0
    %v264 = vsel %vm142, %v257, 0
    %v266 = vsel %vm142, %v259, 0
    %268 = vmatpush.xpose.msra.mxu0 0.0
    %269 = vmatpush.xpose.msra.mxu0 0.0
    %270 = vmatpush.xpose.msra.mxu0 0.0
    %271 = vmatpush.xpose.msra.mxu0 0.0
    %272 = vmatpush.xpose.msra.mxu0 0.0
    %273 = vmatpush.xpose.msra.mxu0 0.0
    %274 = vmatpush.xpose.msra.mxu0 0.0
    %275 = vmatpush.xpose.msra.mxu0 0.0
    %276 = vmatpush.xpose.msra.mxu0 0.0
    %277 = vmatpush.xpose.msra.mxu0 0.0
    %278 = vmatpush.xpose.msra.mxu0 0.0
    %279 = vmatpush.xpose.msra.mxu0 0.0
    %280 = vmatpush.xpose.msra.mxu0 0.0
    %281 = vmatpush.xpose.msra.mxu0 0.0
    %282 = vmatpush.xpose.msra.mxu0 %v266
    %283 = vmatpush.xpose.msra.mxu0 %v264
    %284 = vmatmul.f32.gmra.mxu0 %v260
    %v285 = vpop.f32.mrf.mxu0
    %v286 = vadd.f32 0.0, %v285
    %287 = vmatmul.f32.gmra.mxu0 %v262
    %v288 = vpop.f32.mrf.mxu0
    %v289 = vadd.f32 0.0, %v288
    %290 = vdwg.mxu0
    %v291 = vsel %vm174, %v286, -inf
    %292 = vmax.xlane.f32.xlu0 %v291
    %v293 = vpop.xlane.xlu0 %292
    %v294 = vsel %vm174, %v289, -inf
    %295 = vmax.xlane.f32.xlu0 %v294
    %v296 = vpop.xlane.xlu0 %295
    %v297 = vsub.f32 %v286, %v293
    %v298 = vsub.f32 %v289, %v296
    %v299 = vmul.f32 %v297, 1.442695
    %v300 = vpow.pop %v299
    %v301 = vmul.f32 %v298, 1.442695
    %v302 = vpow.pop %v301
    %v303 = vsel %vm174, %v300, 0.0
    %304 = vadd.xlane.f32.xlu0 %v303
    %v305 = vpop.xlane.xlu0 %304
    %v306 = vsel %vm174, %v302, 0.0
    %307 = vadd.xlane.f32.xlu0 %v306
    %v308 = vpop.xlane.xlu0 %307
    %311 = vrot.lane.b32.xlu0 %v131, 120
    %v312 = vpop.permute.xlu0 %311
    %313 = vrot.lane.b32.xlu0 %v134, 120
    %v314 = vpop.permute.xlu0 %313
    %v318 = vsel %vm174, %v300, 0
    %v321 = vsel %vm174, %v302, 0
    %323 = vmatpush.msra.mxu0 0.0
    %324 = vmatpush.msra.mxu0 0.0
    %325 = vmatpush.msra.mxu0 0.0
    %326 = vmatpush.msra.mxu0 0.0
    %327 = vmatpush.msra.mxu0 0.0
    %328 = vmatpush.msra.mxu0 0.0
    %329 = vmatpush.msra.mxu0 0.0
    %330 = vmatpush.msra.mxu0 0.0
    %331 = vmatpush.msra.mxu0 0.0
    %332 = vmatpush.msra.mxu0 0.0
    %333 = vmatpush.msra.mxu0 0.0
    %334 = vmatpush.msra.mxu0 0.0
    %335 = vmatpush.msra.mxu0 0.0
    %336 = vmatpush.msra.mxu0 0.0
    %337 = vmatpush.msra.mxu0 %v314
    %338 = vmatpush.msra.mxu0 %v312
    %339 = vmatmul.f32.gmra.mxu0 %v318
    %v340 = vpop.f32.mrf.mxu0
    %v341 = vadd.f32 0.0, %v340
    %342 = vmatmul.f32.gmra.mxu0 %v321
    %v343 = vpop.f32.mrf.mxu0
    %v344 = vadd.f32 0.0, %v343
    %345 = vdwg.mxu0
    %v346 = vrcp.pop %v305
    %v347 = vmul.f32 %v305, %v346
    %v348 = vsub.f32 1.0, %v347
    %v349 = vmul.f32 %v346, %v348
    %v350 = vadd.f32 %v346, %v349
    %vm351 = vweird.f32 %v305
    %vm352 = vweird.f32 %v346
    %vm353 = vmor %vm351, %vm352
    %v354 = vsel %vm353, %v346, %v350
    %v355 = vand.u32 2147483647, %v305
    %vm356 = vcmp.eq.f32.partialorder %v355, 8.507059e+37
    %v357 = vand.u32 %v305, 2147483648
    %v358 = vor.u32 1.1754944e-38, %v357
    %v359 = vsel %vm356, %v358, %v354
    %v360 = vrcp.pop %v308
    %v361 = vmul.f32 %v308, %v360
    %v362 = vsub.f32 1.0, %v361
    %v363 = vmul.f32 %v360, %v362
    %v364 = vadd.f32 %v360, %v363
    %vm365 = vweird.f32 %v308
    %vm366 = vweird.f32 %v360
    %vm367 = vmor %vm365, %vm366
    %v368 = vsel %vm367, %v360, %v364
    %v369 = vand.u32 2147483647, %v308
    %vm370 = vcmp.eq.f32.partialorder %v369, 8.507059e+37
    %v371 = vand.u32 %v308, 2147483648
    %v372 = vor.u32 1.1754944e-38, %v371
    %v373 = vsel %vm370, %v372, %v368
    %v374 = vmul.f32 %v341, %v359
    %v375 = vmul.f32 %v344, %v373
    %376 = vrot.lane.b32.xlu0 %v108, 112
    %v377 = vpop.permute.xlu0 %376
    %378 = vrot.lane.b32.xlu0 %v111, 112
    %v379 = vpop.permute.xlu0 %378
    %380 = vrot.lane.b32.xlu0 %v108, 48
    %v381 = vpop.permute.xlu0 %380
    %382 = vrot.lane.b32.xlu0 %v111, 48
    %v383 = vpop.permute.xlu0 %382
    %v384 = vsel %vm142, %v377, 0
    %v386 = vsel %vm142, %v379, 0
    %v388 = vsel %vm142, %v381, 0
    %v390 = vsel %vm142, %v383, 0
    %392 = vmatpush.xpose.msra.mxu0 0.0
    %393 = vmatpush.xpose.msra.mxu0 0.0
    %394 = vmatpush.xpose.msra.mxu0 0.0
    %395 = vmatpush.xpose.msra.mxu0 0.0
    %396 = vmatpush.xpose.msra.mxu0 0.0
    %397 = vmatpush.xpose.msra.mxu0 0.0
    %398 = vmatpush.xpose.msra.mxu0 0.0
    %399 = vmatpush.xpose.msra.mxu0 0.0
    %400 = vmatpush.xpose.msra.mxu0 0.0
    %401 = vmatpush.xpose.msra.mxu0 0.0
    %402 = vmatpush.xpose.msra.mxu0 0.0
    %403 = vmatpush.xpose.msra.mxu0 0.0
    %404 = vmatpush.xpose.msra.mxu0 0.0
    %405 = vmatpush.xpose.msra.mxu0 0.0
    %406 = vmatpush.xpose.msra.mxu0 %v390
    %407 = vmatpush.xpose.msra.mxu0 %v388
    %408 = vmatmul.f32.gmra.mxu0 %v384
    %v409 = vpop.f32.mrf.mxu0
    %v410 = vadd.f32 0.0, %v409
    %411 = vmatmul.f32.gmra.mxu0 %v386
    %v412 = vpop.f32.mrf.mxu0
    %v413 = vadd.f32 0.0, %v412
    %414 = vdwg.mxu0
    %v415 = vsel %vm174, %v410, -inf
    %416 = vmax.xlane.f32.xlu0 %v415
    %v417 = vpop.xlane.xlu0 %416
    %v418 = vsel %vm174, %v413, -inf
    %419 = vmax.xlane.f32.xlu0 %v418
    %v420 = vpop.xlane.xlu0 %419
    %v421 = vsub.f32 %v410, %v417
    %v422 = vsub.f32 %v413, %v420
    %v423 = vmul.f32 %v421, 1.442695
    %v424 = vpow.pop %v423
    %v425 = vmul.f32 %v422, 1.442695
    %v426 = vpow.pop %v425
    %v427 = vsel %vm174, %v424, 0.0
    %428 = vadd.xlane.f32.xlu0 %v427
    %v429 = vpop.xlane.xlu0 %428
    %v430 = vsel %vm174, %v426, 0.0
    %431 = vadd.xlane.f32.xlu0 %v430
    %v432 = vpop.xlane.xlu0 %431
    %433 = vrot.lane.b32.xlu0 %v131, 112
    %v434 = vpop.permute.xlu0 %433
    %435 = vrot.lane.b32.xlu0 %v134, 112
    %v436 = vpop.permute.xlu0 %435
    %v440 = vsel %vm174, %v424, 0
    %v443 = vsel %vm174, %v426, 0
    %445 = vmatpush.msra.mxu0 0.0
    %446 = vmatpush.msra.mxu0 0.0
    %447 = vmatpush.msra.mxu0 0.0
    %448 = vmatpush.msra.mxu0 0.0
    %449 = vmatpush.msra.mxu0 0.0
    %450 = vmatpush.msra.mxu0 0.0
    %451 = vmatpush.msra.mxu0 0.0
    %452 = vmatpush.msra.mxu0 0.0
    %453 = vmatpush.msra.mxu0 0.0
    %454 = vmatpush.msra.mxu0 0.0
    %455 = vmatpush.msra.mxu0 0.0
    %456 = vmatpush.msra.mxu0 0.0
    %457 = vmatpush.msra.mxu0 0.0
    %458 = vmatpush.msra.mxu0 0.0
    %459 = vmatpush.msra.mxu0 %v436
    %460 = vmatpush.msra.mxu0 %v434
    %461 = vmatmul.f32.gmra.mxu0 %v440
    %v462 = vpop.f32.mrf.mxu0
    %v463 = vadd.f32 0.0, %v462
    %464 = vmatmul.f32.gmra.mxu0 %v443
    %v465 = vpop.f32.mrf.mxu0
    %v466 = vadd.f32 0.0, %v465
    %467 = vdwg.mxu0
    %v468 = vrcp.pop %v429
    %v469 = vmul.f32 %v429, %v468
    %v470 = vsub.f32 1.0, %v469
    %v471 = vmul.f32 %v468, %v470
    %v472 = vadd.f32 %v468, %v471
    %vm473 = vweird.f32 %v429
    %vm474 = vweird.f32 %v468
    %vm475 = vmor %vm473, %vm474
    %v476 = vsel %vm475, %v468, %v472
    %v477 = vand.u32 2147483647, %v429
    %vm478 = vcmp.eq.f32.partialorder %v477, 8.507059e+37
    %v479 = vand.u32 %v429, 2147483648
    %v480 = vor.u32 1.1754944e-38, %v479
    %v481 = vsel %vm478, %v480, %v476
    %v482 = vrcp.pop %v432
    %v483 = vmul.f32 %v432, %v482
    %v484 = vsub.f32 1.0, %v483
    %v485 = vmul.f32 %v482, %v484
    %v486 = vadd.f32 %v482, %v485
    %vm487 = vweird.f32 %v432
    %vm488 = vweird.f32 %v482
    %vm489 = vmor %vm487, %vm488
    %v490 = vsel %vm489, %v482, %v486
    %v491 = vand.u32 2147483647, %v432
    %vm492 = vcmp.eq.f32.partialorder %v491, 8.507059e+37
    %v493 = vand.u32 %v432, 2147483648
    %v494 = vor.u32 1.1754944e-38, %v493
    %v495 = vsel %vm492, %v494, %v490
    %v496 = vmul.f32 %v463, %v481
    %v497 = vmul.f32 %v466, %v495
    %498 = vrot.lane.b32.xlu0 %v108, 104
    %v499 = vpop.permute.xlu0 %498
    %500 = vrot.lane.b32.xlu0 %v111, 104
    %v501 = vpop.permute.xlu0 %500
    %502 = vrot.lane.b32.xlu0 %v108, 40
    %v503 = vpop.permute.xlu0 %502
    %504 = vrot.lane.b32.xlu0 %v111, 40
    %v505 = vpop.permute.xlu0 %504
    %v506 = vsel %vm142, %v499, 0
    %v508 = vsel %vm142, %v501, 0
    %v510 = vsel %vm142, %v503, 0
    %v512 = vsel %vm142, %v505, 0
    %514 = vmatpush.xpose.msra.mxu0 0.0
    %515 = vmatpush.xpose.msra.mxu0 0.0
    %516 = vmatpush.xpose.msra.mxu0 0.0
    %517 = vmatpush.xpose.msra.mxu0 0.0
    %518 = vmatpush.xpose.msra.mxu0 0.0
    %519 = vmatpush.xpose.msra.mxu0 0.0
    %520 = vmatpush.xpose.msra.mxu0 0.0
    %521 = vmatpush.xpose.msra.mxu0 0.0
    %522 = vmatpush.xpose.msra.mxu0 0.0
    %523 = vmatpush.xpose.msra.mxu0 0.0
    %524 = vmatpush.xpose.msra.mxu0 0.0
    %525 = vmatpush.xpose.msra.mxu0 0.0
    %526 = vmatpush.xpose.msra.mxu0 0.0
    %527 = vmatpush.xpose.msra.mxu0 0.0
    %528 = vmatpush.xpose.msra.mxu0 %v512
    %529 = vmatpush.xpose.msra.mxu0 %v510
    %530 = vmatmul.f32.gmra.mxu0 %v506
    %v531 = vpop.f32.mrf.mxu0
    %v532 = vadd.f32 0.0, %v531
    %533 = vmatmul.f32.gmra.mxu0 %v508
    %v534 = vpop.f32.mrf.mxu0
    %v535 = vadd.f32 0.0, %v534
    %536 = vdwg.mxu0
    %v537 = vsel %vm174, %v532, -inf
    %538 = vmax.xlane.f32.xlu0 %v537
    %v539 = vpop.xlane.xlu0 %538
    %v540 = vsel %vm174, %v535, -inf
    %541 = vmax.xlane.f32.xlu0 %v540
    %v542 = vpop.xlane.xlu0 %541
    %v543 = vsub.f32 %v532, %v539
    %v544 = vsub.f32 %v535, %v542
    %v545 = vmul.f32 %v543, 1.442695
    %v546 = vpow.pop %v545
    %v547 = vmul.f32 %v544, 1.442695
    %v548 = vpow.pop %v547
    %v549 = vsel %vm174, %v546, 0.0
    %550 = vadd.xlane.f32.xlu0 %v549
    %v551 = vpop.xlane.xlu0 %550
    %v552 = vsel %vm174, %v548, 0.0
    %553 = vadd.xlane.f32.xlu0 %v552
    %v554 = vpop.xlane.xlu0 %553
    %555 = vrot.lane.b32.xlu0 %v131, 104
    %v556 = vpop.permute.xlu0 %555
    %557 = vrot.lane.b32.xlu0 %v134, 104
    %v558 = vpop.permute.xlu0 %557
    %v562 = vsel %vm174, %v546, 0
    %v565 = vsel %vm174, %v548, 0
    %567 = vmatpush.msra.mxu0 0.0
    %568 = vmatpush.msra.mxu0 0.0
    %569 = vmatpush.msra.mxu0 0.0
    %570 = vmatpush.msra.mxu0 0.0
    %571 = vmatpush.msra.mxu0 0.0
    %572 = vmatpush.msra.mxu0 0.0
    %573 = vmatpush.msra.mxu0 0.0
    %574 = vmatpush.msra.mxu0 0.0
    %575 = vmatpush.msra.mxu0 0.0
    %576 = vmatpush.msra.mxu0 0.0
    %577 = vmatpush.msra.mxu0 0.0
    %578 = vmatpush.msra.mxu0 0.0
    %579 = vmatpush.msra.mxu0 0.0
    %580 = vmatpush.msra.mxu0 0.0
    %581 = vmatpush.msra.mxu0 %v558
    %582 = vmatpush.msra.mxu0 %v556
    %583 = vmatmul.f32.gmra.mxu0 %v562
    %v584 = vpop.f32.mrf.mxu0
    %v585 = vadd.f32 0.0, %v584
    %586 = vmatmul.f32.gmra.mxu0 %v565
    %v587 = vpop.f32.mrf.mxu0
    %v588 = vadd.f32 0.0, %v587
    %589 = vdwg.mxu0
    %v590 = vrcp.pop %v551
    %v591 = vmul.f32 %v551, %v590
    %v592 = vsub.f32 1.0, %v591
    %v593 = vmul.f32 %v590, %v592
    %v594 = vadd.f32 %v590, %v593
    %vm595 = vweird.f32 %v551
    %vm596 = vweird.f32 %v590
    %vm597 = vmor %vm595, %vm596
    %v598 = vsel %vm597, %v590, %v594
    %v599 = vand.u32 2147483647, %v551
    %vm600 = vcmp.eq.f32.partialorder %v599, 8.507059e+37
    %v601 = vand.u32 %v551, 2147483648
    %v602 = vor.u32 1.1754944e-38, %v601
    %v603 = vsel %vm600, %v602, %v598
    %v604 = vrcp.pop %v554
    %v605 = vmul.f32 %v554, %v604
    %v606 = vsub.f32 1.0, %v605
    %v607 = vmul.f32 %v604, %v606
    %v608 = vadd.f32 %v604, %v607
    %vm609 = vweird.f32 %v554
    %vm610 = vweird.f32 %v604
    %vm611 = vmor %vm609, %vm610
    %v612 = vsel %vm611, %v604, %v608
    %v613 = vand.u32 2147483647, %v554
    %vm614 = vcmp.eq.f32.partialorder %v613, 8.507059e+37
    %v615 = vand.u32 %v554, 2147483648
    %v616 = vor.u32 1.1754944e-38, %v615
    %v617 = vsel %vm614, %v616, %v612
    %v618 = vmul.f32 %v585, %v603
    %v619 = vmul.f32 %v588, %v617
    %620 = vrot.lane.b32.xlu0 %v108, 96
    %v621 = vpop.permute.xlu0 %620
    %622 = vrot.lane.b32.xlu0 %v111, 96
    %v623 = vpop.permute.xlu0 %622
    %624 = vrot.lane.b32.xlu0 %v108, 32
    %v625 = vpop.permute.xlu0 %624
    %626 = vrot.lane.b32.xlu0 %v111, 32
    %v627 = vpop.permute.xlu0 %626
    %v628 = vsel %vm142, %v621, 0
    %v630 = vsel %vm142, %v623, 0
    %v632 = vsel %vm142, %v625, 0
    %v634 = vsel %vm142, %v627, 0
    %636 = vmatpush.xpose.msra.mxu0 0.0
    %637 = vmatpush.xpose.msra.mxu0 0.0
    %638 = vmatpush.xpose.msra.mxu0 0.0
    %639 = vmatpush.xpose.msra.mxu0 0.0
    %640 = vmatpush.xpose.msra.mxu0 0.0
    %641 = vmatpush.xpose.msra.mxu0 0.0
    %642 = vmatpush.xpose.msra.mxu0 0.0
    %643 = vmatpush.xpose.msra.mxu0 0.0
    %644 = vmatpush.xpose.msra.mxu0 0.0
    %645 = vmatpush.xpose.msra.mxu0 0.0
    %646 = vmatpush.xpose.msra.mxu0 0.0
    %647 = vmatpush.xpose.msra.mxu0 0.0
    %648 = vmatpush.xpose.msra.mxu0 0.0
    %649 = vmatpush.xpose.msra.mxu0 0.0
    %650 = vmatpush.xpose.msra.mxu0 %v634
    %651 = vmatpush.xpose.msra.mxu0 %v632
    %652 = vmatmul.f32.gmra.mxu0 %v628
    %v653 = vpop.f32.mrf.mxu0
    %v654 = vadd.f32 0.0, %v653
    %655 = vmatmul.f32.gmra.mxu0 %v630
    %v656 = vpop.f32.mrf.mxu0
    %v657 = vadd.f32 0.0, %v656
    %658 = vdwg.mxu0
    %v659 = vsel %vm174, %v654, -inf
    %660 = vmax.xlane.f32.xlu0 %v659
    %v661 = vpop.xlane.xlu0 %660
    %v662 = vsel %vm174, %v657, -inf
    %663 = vmax.xlane.f32.xlu0 %v662
    %v664 = vpop.xlane.xlu0 %663
    %v665 = vsub.f32 %v654, %v661
    %v666 = vsub.f32 %v657, %v664
    %v667 = vmul.f32 %v665, 1.442695
    %v668 = vpow.pop %v667
    %v669 = vmul.f32 %v666, 1.442695
    %v670 = vpow.pop %v669
    %v671 = vsel %vm174, %v668, 0.0
    %672 = vadd.xlane.f32.xlu0 %v671
    %v673 = vpop.xlane.xlu0 %672
    %v674 = vsel %vm174, %v670, 0.0
    %675 = vadd.xlane.f32.xlu0 %v674
    %v676 = vpop.xlane.xlu0 %675
    %677 = vrot.lane.b32.xlu0 %v131, 96
    %v678 = vpop.permute.xlu0 %677
    %679 = vrot.lane.b32.xlu0 %v134, 96
    %v680 = vpop.permute.xlu0 %679
    %v684 = vsel %vm174, %v668, 0
    %v687 = vsel %vm174, %v670, 0
    %689 = vmatpush.msra.mxu0 0.0
    %690 = vmatpush.msra.mxu0 0.0
    %691 = vmatpush.msra.mxu0 0.0
    %692 = vmatpush.msra.mxu0 0.0
    %693 = vmatpush.msra.mxu0 0.0
    %694 = vmatpush.msra.mxu0 0.0
    %695 = vmatpush.msra.mxu0 0.0
    %696 = vmatpush.msra.mxu0 0.0
    %697 = vmatpush.msra.mxu0 0.0
    %698 = vmatpush.msra.mxu0 0.0
    %699 = vmatpush.msra.mxu0 0.0
    %700 = vmatpush.msra.mxu0 0.0
    %701 = vmatpush.msra.mxu0 0.0
    %702 = vmatpush.msra.mxu0 0.0
    %703 = vmatpush.msra.mxu0 %v680
    %704 = vmatpush.msra.mxu0 %v678
    %705 = vmatmul.f32.gmra.mxu0 %v684
    %v706 = vpop.f32.mrf.mxu0
    %v707 = vadd.f32 0.0, %v706
    %708 = vmatmul.f32.gmra.mxu0 %v687
    %v709 = vpop.f32.mrf.mxu0
    %v710 = vadd.f32 0.0, %v709
    %711 = vdwg.mxu0
    %v712 = vrcp.pop %v673
    %v713 = vmul.f32 %v673, %v712
    %v714 = vsub.f32 1.0, %v713
    %v715 = vmul.f32 %v712, %v714
    %v716 = vadd.f32 %v712, %v715
    %vm717 = vweird.f32 %v673
    %vm718 = vweird.f32 %v712
    %vm719 = vmor %vm717, %vm718
    %v720 = vsel %vm719, %v712, %v716
    %v721 = vand.u32 2147483647, %v673
    %vm722 = vcmp.eq.f32.partialorder %v721, 8.507059e+37
    %v723 = vand.u32 %v673, 2147483648
    %v724 = vor.u32 1.1754944e-38, %v723
    %v725 = vsel %vm722, %v724, %v720
    %v726 = vrcp.pop %v676
    %v727 = vmul.f32 %v676, %v726
    %v728 = vsub.f32 1.0, %v727
    %v729 = vmul.f32 %v726, %v728
    %v730 = vadd.f32 %v726, %v729
    %vm731 = vweird.f32 %v676
    %vm732 = vweird.f32 %v726
    %vm733 = vmor %vm731, %vm732
    %v734 = vsel %vm733, %v726, %v730
    %v735 = vand.u32 2147483647, %v676
    %vm736 = vcmp.eq.f32.partialorder %v735, 8.507059e+37
    %v737 = vand.u32 %v676, 2147483648
    %v738 = vor.u32 1.1754944e-38, %v737
    %v739 = vsel %vm736, %v738, %v734
    %v740 = vmul.f32 %v707, %v725
    %v741 = vmul.f32 %v710, %v739
    %742 = vrot.lane.b32.xlu0 %v108, 88
    %v743 = vpop.permute.xlu0 %742
    %744 = vrot.lane.b32.xlu0 %v111, 88
    %v745 = vpop.permute.xlu0 %744
    %746 = vrot.lane.b32.xlu0 %v108, 24
    %v747 = vpop.permute.xlu0 %746
    %748 = vrot.lane.b32.xlu0 %v111, 24
    %v749 = vpop.permute.xlu0 %748
    %v750 = vsel %vm142, %v743, 0
    %v752 = vsel %vm142, %v745, 0
    %v754 = vsel %vm142, %v747, 0
    %v756 = vsel %vm142, %v749, 0
    %758 = vmatpush.xpose.msra.mxu0 0.0
    %759 = vmatpush.xpose.msra.mxu0 0.0
    %760 = vmatpush.xpose.msra.mxu0 0.0
    %761 = vmatpush.xpose.msra.mxu0 0.0
    %762 = vmatpush.xpose.msra.mxu0 0.0
    %763 = vmatpush.xpose.msra.mxu0 0.0
    %764 = vmatpush.xpose.msra.mxu0 0.0
    %765 = vmatpush.xpose.msra.mxu0 0.0
    %766 = vmatpush.xpose.msra.mxu0 0.0
    %767 = vmatpush.xpose.msra.mxu0 0.0
    %768 = vmatpush.xpose.msra.mxu0 0.0
    %769 = vmatpush.xpose.msra.mxu0 0.0
    %770 = vmatpush.xpose.msra.mxu0 0.0
    %771 = vmatpush.xpose.msra.mxu0 0.0
    %772 = vmatpush.xpose.msra.mxu0 %v756
    %773 = vmatpush.xpose.msra.mxu0 %v754
    %774 = vmatmul.f32.gmra.mxu0 %v750
    %v775 = vpop.f32.mrf.mxu0
    %v776 = vadd.f32 0.0, %v775
    %777 = vmatmul.f32.gmra.mxu0 %v752
    %v778 = vpop.f32.mrf.mxu0
    %v779 = vadd.f32 0.0, %v778
    %780 = vdwg.mxu0
    %v781 = vsel %vm174, %v776, -inf
    %782 = vmax.xlane.f32.xlu0 %v781
    %v783 = vpop.xlane.xlu0 %782
    %v784 = vsel %vm174, %v779, -inf
    %785 = vmax.xlane.f32.xlu0 %v784
    %v786 = vpop.xlane.xlu0 %785
    %v787 = vsub.f32 %v776, %v783
    %v788 = vsub.f32 %v779, %v786
    %v789 = vmul.f32 %v787, 1.442695
    %v790 = vpow.pop %v789
    %v791 = vmul.f32 %v788, 1.442695
    %v792 = vpow.pop %v791
    %v793 = vsel %vm174, %v790, 0.0
    %794 = vadd.xlane.f32.xlu0 %v793
    %v795 = vpop.xlane.xlu0 %794
    %v796 = vsel %vm174, %v792, 0.0
    %797 = vadd.xlane.f32.xlu0 %v796
    %v798 = vpop.xlane.xlu0 %797
    %799 = vrot.lane.b32.xlu0 %v131, 88
    %v800 = vpop.permute.xlu0 %799
    %801 = vrot.lane.b32.xlu0 %v134, 88
    %v802 = vpop.permute.xlu0 %801
    %v806 = vsel %vm174, %v790, 0
    %v809 = vsel %vm174, %v792, 0
    %811 = vmatpush.msra.mxu0 0.0
    %812 = vmatpush.msra.mxu0 0.0
    %813 = vmatpush.msra.mxu0 0.0
    %814 = vmatpush.msra.mxu0 0.0
    %815 = vmatpush.msra.mxu0 0.0
    %816 = vmatpush.msra.mxu0 0.0
    %817 = vmatpush.msra.mxu0 0.0
    %818 = vmatpush.msra.mxu0 0.0
    %819 = vmatpush.msra.mxu0 0.0
    %820 = vmatpush.msra.mxu0 0.0
    %821 = vmatpush.msra.mxu0 0.0
    %822 = vmatpush.msra.mxu0 0.0
    %823 = vmatpush.msra.mxu0 0.0
    %824 = vmatpush.msra.mxu0 0.0
    %825 = vmatpush.msra.mxu0 %v802
    %826 = vmatpush.msra.mxu0 %v800
    %827 = vmatmul.f32.gmra.mxu0 %v806
    %v828 = vpop.f32.mrf.mxu0
    %v829 = vadd.f32 0.0, %v828
    %830 = vmatmul.f32.gmra.mxu0 %v809
    %v831 = vpop.f32.mrf.mxu0
    %v832 = vadd.f32 0.0, %v831
    %833 = vdwg.mxu0
    %v834 = vrcp.pop %v795
    %v835 = vmul.f32 %v795, %v834
    %v836 = vsub.f32 1.0, %v835
    %v837 = vmul.f32 %v834, %v836
    %v838 = vadd.f32 %v834, %v837
    %vm839 = vweird.f32 %v795
    %vm840 = vweird.f32 %v834
    %vm841 = vmor %vm839, %vm840
    %v842 = vsel %vm841, %v834, %v838
    %v843 = vand.u32 2147483647, %v795
    %vm844 = vcmp.eq.f32.partialorder %v843, 8.507059e+37
    %v845 = vand.u32 %v795, 2147483648
    %v846 = vor.u32 1.1754944e-38, %v845
    %v847 = vsel %vm844, %v846, %v842
    %v848 = vrcp.pop %v798
    %v849 = vmul.f32 %v798, %v848
    %v850 = vsub.f32 1.0, %v849
    %v851 = vmul.f32 %v848, %v850
    %v852 = vadd.f32 %v848, %v851
    %vm853 = vweird.f32 %v798
    %vm854 = vweird.f32 %v848
    %vm855 = vmor %vm853, %vm854
    %v856 = vsel %vm855, %v848, %v852
    %v857 = vand.u32 2147483647, %v798
    %vm858 = vcmp.eq.f32.partialorder %v857, 8.507059e+37
    %v859 = vand.u32 %v798, 2147483648
    %v860 = vor.u32 1.1754944e-38, %v859
    %v861 = vsel %vm858, %v860, %v856
    %v862 = vmul.f32 %v829, %v847
    %v863 = vmul.f32 %v832, %v861
    %864 = vrot.lane.b32.xlu0 %v108, 80
    %v865 = vpop.permute.xlu0 %864
    %866 = vrot.lane.b32.xlu0 %v111, 80
    %v867 = vpop.permute.xlu0 %866
    %868 = vrot.lane.b32.xlu0 %v108, 16
    %v869 = vpop.permute.xlu0 %868
    %870 = vrot.lane.b32.xlu0 %v111, 16
    %v871 = vpop.permute.xlu0 %870
    %v872 = vsel %vm142, %v865, 0
    %v874 = vsel %vm142, %v867, 0
    %v876 = vsel %vm142, %v869, 0
    %v878 = vsel %vm142, %v871, 0
    %880 = vmatpush.xpose.msra.mxu0 0.0
    %881 = vmatpush.xpose.msra.mxu0 0.0
    %882 = vmatpush.xpose.msra.mxu0 0.0
    %883 = vmatpush.xpose.msra.mxu0 0.0
    %884 = vmatpush.xpose.msra.mxu0 0.0
    %885 = vmatpush.xpose.msra.mxu0 0.0
    %886 = vmatpush.xpose.msra.mxu0 0.0
    %887 = vmatpush.xpose.msra.mxu0 0.0
    %888 = vmatpush.xpose.msra.mxu0 0.0
    %889 = vmatpush.xpose.msra.mxu0 0.0
    %890 = vmatpush.xpose.msra.mxu0 0.0
    %891 = vmatpush.xpose.msra.mxu0 0.0
    %892 = vmatpush.xpose.msra.mxu0 0.0
    %893 = vmatpush.xpose.msra.mxu0 0.0
    %894 = vmatpush.xpose.msra.mxu0 %v878
    %895 = vmatpush.xpose.msra.mxu0 %v876
    %896 = vmatmul.f32.gmra.mxu0 %v872
    %v897 = vpop.f32.mrf.mxu0
    %v898 = vadd.f32 0.0, %v897
    %899 = vmatmul.f32.gmra.mxu0 %v874
    %v900 = vpop.f32.mrf.mxu0
    %v901 = vadd.f32 0.0, %v900
    %902 = vdwg.mxu0
    %v903 = vsel %vm174, %v898, -inf
    %904 = vmax.xlane.f32.xlu0 %v903
    %v905 = vpop.xlane.xlu0 %904
    %v906 = vsel %vm174, %v901, -inf
    %907 = vmax.xlane.f32.xlu0 %v906
    %v908 = vpop.xlane.xlu0 %907
    %v909 = vsub.f32 %v898, %v905
    %v910 = vsub.f32 %v901, %v908
    %v911 = vmul.f32 %v909, 1.442695
    %v912 = vpow.pop %v911
    %v913 = vmul.f32 %v910, 1.442695
    %v914 = vpow.pop %v913
    %v915 = vsel %vm174, %v912, 0.0
    %916 = vadd.xlane.f32.xlu0 %v915
    %v917 = vpop.xlane.xlu0 %916
    %v918 = vsel %vm174, %v914, 0.0
    %919 = vadd.xlane.f32.xlu0 %v918
    %v920 = vpop.xlane.xlu0 %919
    %921 = vrot.lane.b32.xlu0 %v131, 80
    %v922 = vpop.permute.xlu0 %921
    %923 = vrot.lane.b32.xlu0 %v134, 80
    %v924 = vpop.permute.xlu0 %923
    %v928 = vsel %vm174, %v912, 0
    %v931 = vsel %vm174, %v914, 0
    %933 = vmatpush.msra.mxu0 0.0
    %934 = vmatpush.msra.mxu0 0.0
    %935 = vmatpush.msra.mxu0 0.0
    %936 = vmatpush.msra.mxu0 0.0
    %937 = vmatpush.msra.mxu0 0.0
    %938 = vmatpush.msra.mxu0 0.0
    %939 = vmatpush.msra.mxu0 0.0
    %940 = vmatpush.msra.mxu0 0.0
    %941 = vmatpush.msra.mxu0 0.0
    %942 = vmatpush.msra.mxu0 0.0
    %943 = vmatpush.msra.mxu0 0.0
    %944 = vmatpush.msra.mxu0 0.0
    %945 = vmatpush.msra.mxu0 0.0
    %946 = vmatpush.msra.mxu0 0.0
    %947 = vmatpush.msra.mxu0 %v924
    %948 = vmatpush.msra.mxu0 %v922
    %949 = vmatmul.f32.gmra.mxu0 %v928
    %v950 = vpop.f32.mrf.mxu0
    %v951 = vadd.f32 0.0, %v950
    %952 = vmatmul.f32.gmra.mxu0 %v931
    %v953 = vpop.f32.mrf.mxu0
    %v954 = vadd.f32 0.0, %v953
    %955 = vdwg.mxu0
    %v956 = vrcp.pop %v917
    %v957 = vmul.f32 %v917, %v956
    %v958 = vsub.f32 1.0, %v957
    %v959 = vmul.f32 %v956, %v958
    %v960 = vadd.f32 %v956, %v959
    %vm961 = vweird.f32 %v917
    %vm962 = vweird.f32 %v956
    %vm963 = vmor %vm961, %vm962
    %v964 = vsel %vm963, %v956, %v960
    %v965 = vand.u32 2147483647, %v917
    %vm966 = vcmp.eq.f32.partialorder %v965, 8.507059e+37
    %v967 = vand.u32 %v917, 2147483648
    %v968 = vor.u32 1.1754944e-38, %v967
    %v969 = vsel %vm966, %v968, %v964
    %v970 = vrcp.pop %v920
    %v971 = vmul.f32 %v920, %v970
    %v972 = vsub.f32 1.0, %v971
    %v973 = vmul.f32 %v970, %v972
    %v974 = vadd.f32 %v970, %v973
    %vm975 = vweird.f32 %v920
    %vm976 = vweird.f32 %v970
    %vm977 = vmor %vm975, %vm976
    %v978 = vsel %vm977, %v970, %v974
    %v979 = vand.u32 2147483647, %v920
    %vm980 = vcmp.eq.f32.partialorder %v979, 8.507059e+37
    %v981 = vand.u32 %v920, 2147483648
    %v982 = vor.u32 1.1754944e-38, %v981
    %v983 = vsel %vm980, %v982, %v978
    %v984 = vmul.f32 %v951, %v969
    %v985 = vmul.f32 %v954, %v983
    %986 = vrot.lane.b32.xlu0 %v108, 72
    %v987 = vpop.permute.xlu0 %986
    %988 = vrot.lane.b32.xlu0 %v111, 72
    %v989 = vpop.permute.xlu0 %988
    %990 = vrot.lane.b32.xlu0 %v108, 8
    %v991 = vpop.permute.xlu0 %990
    %992 = vrot.lane.b32.xlu0 %v111, 8
    %v993 = vpop.permute.xlu0 %992
    %v994 = vsel %vm142, %v987, 0
    %v996 = vsel %vm142, %v989, 0
    %v998 = vsel %vm142, %v991, 0
    %v1000 = vsel %vm142, %v993, 0
    %1002 = vmatpush.xpose.msra.mxu0 0.0
    %1003 = vmatpush.xpose.msra.mxu0 0.0
    %1004 = vmatpush.xpose.msra.mxu0 0.0
    %1005 = vmatpush.xpose.msra.mxu0 0.0
    %1006 = vmatpush.xpose.msra.mxu0 0.0
    %1007 = vmatpush.xpose.msra.mxu0 0.0
    %1008 = vmatpush.xpose.msra.mxu0 0.0
    %1009 = vmatpush.xpose.msra.mxu0 0.0
    %1010 = vmatpush.xpose.msra.mxu0 0.0
    %1011 = vmatpush.xpose.msra.mxu0 0.0
    %1012 = vmatpush.xpose.msra.mxu0 0.0
    %1013 = vmatpush.xpose.msra.mxu0 0.0
    %1014 = vmatpush.xpose.msra.mxu0 0.0
    %1015 = vmatpush.xpose.msra.mxu0 0.0
    %1016 = vmatpush.xpose.msra.mxu0 %v1000
    %1017 = vmatpush.xpose.msra.mxu0 %v998
    %1018 = vmatmul.f32.gmra.mxu0 %v994
    %v1019 = vpop.f32.mrf.mxu0
    %v1020 = vadd.f32 0.0, %v1019
    %1021 = vmatmul.f32.gmra.mxu0 %v996
    %v1022 = vpop.f32.mrf.mxu0
    %v1023 = vadd.f32 0.0, %v1022
    %1024 = vdwg.mxu0
    %v1025 = vsel %vm174, %v1020, -inf
    %1026 = vmax.xlane.f32.xlu0 %v1025
    %v1027 = vpop.xlane.xlu0 %1026
    %v1028 = vsel %vm174, %v1023, -inf
    %1029 = vmax.xlane.f32.xlu0 %v1028
    %v1030 = vpop.xlane.xlu0 %1029
    %v1031 = vsub.f32 %v1020, %v1027
    %v1032 = vsub.f32 %v1023, %v1030
    %v1033 = vmul.f32 %v1031, 1.442695
    %v1034 = vpow.pop %v1033
    %v1035 = vmul.f32 %v1032, 1.442695
    %v1036 = vpow.pop %v1035
    %v1037 = vsel %vm174, %v1034, 0.0
    %1038 = vadd.xlane.f32.xlu0 %v1037
    %v1039 = vpop.xlane.xlu0 %1038
    %v1040 = vsel %vm174, %v1036, 0.0
    %1041 = vadd.xlane.f32.xlu0 %v1040
    %v1042 = vpop.xlane.xlu0 %1041
    %1043 = vrot.lane.b32.xlu0 %v131, 72
    %v1044 = vpop.permute.xlu0 %1043
    %1045 = vrot.lane.b32.xlu0 %v134, 72
    %v1046 = vpop.permute.xlu0 %1045
    %v1050 = vsel %vm174, %v1034, 0
    %v1053 = vsel %vm174, %v1036, 0
    %1055 = vmatpush.msra.mxu0 0.0
    %1056 = vmatpush.msra.mxu0 0.0
    %1057 = vmatpush.msra.mxu0 0.0
    %1058 = vmatpush.msra.mxu0 0.0
    %1059 = vmatpush.msra.mxu0 0.0
    %1060 = vmatpush.msra.mxu0 0.0
    %1061 = vmatpush.msra.mxu0 0.0
    %1062 = vmatpush.msra.mxu0 0.0
    %1063 = vmatpush.msra.mxu0 0.0
    %1064 = vmatpush.msra.mxu0 0.0
    %1065 = vmatpush.msra.mxu0 0.0
    %1066 = vmatpush.msra.mxu0 0.0
    %1067 = vmatpush.msra.mxu0 0.0
    %1068 = vmatpush.msra.mxu0 0.0
    %1069 = vmatpush.msra.mxu0 %v1046
    %1070 = vmatpush.msra.mxu0 %v1044
    %1071 = vmatmul.f32.gmra.mxu0 %v1050
    %v1072 = vpop.f32.mrf.mxu0
    %v1073 = vadd.f32 0.0, %v1072
    %1074 = vmatmul.f32.gmra.mxu0 %v1053
    %v1075 = vpop.f32.mrf.mxu0
    %v1076 = vadd.f32 0.0, %v1075
    %1077 = vdwg.mxu0
    %v1078 = vrcp.pop %v1039
    %v1079 = vmul.f32 %v1039, %v1078
    %v1080 = vsub.f32 1.0, %v1079
    %v1081 = vmul.f32 %v1078, %v1080
    %v1082 = vadd.f32 %v1078, %v1081
    %vm1083 = vweird.f32 %v1039
    %vm1084 = vweird.f32 %v1078
    %vm1085 = vmor %vm1083, %vm1084
    %v1086 = vsel %vm1085, %v1078, %v1082
    %v1087 = vand.u32 2147483647, %v1039
    %vm1088 = vcmp.eq.f32.partialorder %v1087, 8.507059e+37
    %v1089 = vand.u32 %v1039, 2147483648
    %v1090 = vor.u32 1.1754944e-38, %v1089
    %v1091 = vsel %vm1088, %v1090, %v1086
    %v1092 = vrcp.pop %v1042
    %v1093 = vmul.f32 %v1042, %v1092
    %v1094 = vsub.f32 1.0, %v1093
    %v1095 = vmul.f32 %v1092, %v1094
    %v1096 = vadd.f32 %v1092, %v1095
    %vm1097 = vweird.f32 %v1042
    %vm1098 = vweird.f32 %v1092
    %vm1099 = vmor %vm1097, %vm1098
    %v1100 = vsel %vm1099, %v1092, %v1096
    %v1101 = vand.u32 2147483647, %v1042
    %vm1102 = vcmp.eq.f32.partialorder %v1101, 8.507059e+37
    %v1103 = vand.u32 %v1042, 2147483648
    %v1104 = vor.u32 1.1754944e-38, %v1103
    %v1105 = vsel %vm1102, %v1104, %v1100
    %v1106 = vmul.f32 %v1073, %v1091
    %v1107 = vmul.f32 %v1076, %v1105
    %1110 = vrot.lane.b32.xlu0 %v374, 8
    %v1111 = vpop.permute.xlu0 %1110
    %1112 = vrot.lane.b32.xlu0 %v375, 8
    %v1113 = vpop.permute.xlu0 %1112
    %1118 = vrot.lane.b32.xlu0 %v496, 16
    %v1119 = vpop.permute.xlu0 %1118
    %1120 = vrot.lane.b32.xlu0 %v497, 16
    %v1121 = vpop.permute.xlu0 %1120
    %1126 = vrot.lane.b32.xlu0 %v618, 24
    %v1127 = vpop.permute.xlu0 %1126
    %1128 = vrot.lane.b32.xlu0 %v619, 24
    %v1129 = vpop.permute.xlu0 %1128
    %1134 = vrot.lane.b32.xlu0 %v740, 32
    %v1135 = vpop.permute.xlu0 %1134
    %1136 = vrot.lane.b32.xlu0 %v741, 32
    %v1137 = vpop.permute.xlu0 %1136
    %1142 = vrot.lane.b32.xlu0 %v862, 40
    %v1143 = vpop.permute.xlu0 %1142
    %1144 = vrot.lane.b32.xlu0 %v863, 40
    %v1145 = vpop.permute.xlu0 %1144
    %1150 = vrot.lane.b32.xlu0 %v984, 48
    %v1151 = vpop.permute.xlu0 %1150
    %1152 = vrot.lane.b32.xlu0 %v985, 48
    %v1153 = vpop.permute.xlu0 %1152
    %1158 = vrot.lane.b32.xlu0 %v1106, 56
    %v1159 = vpop.permute.xlu0 %1158
    %1160 = vrot.lane.b32.xlu0 %v1107, 56
    %v1161 = vpop.permute.xlu0 %1160
    %v1164 = vsel %vm142, %v250, %v1111
    %v1165 = vsel %vm142, %v251, %v1113
    %v1166 = vsel %vm174, %v1164, %v1119
    %v1167 = vsel %vm174, %v1165, %v1121
    %vm1168 = vcmask 195584
    %v1169 = vsel %vm1168, %v1166, %v1127
    %v1170 = vsel %vm1168, %v1167, %v1129
    %vm1171 = vcmask 261120
    %v1172 = vsel %vm1171, %v1169, %v1135
    %v1173 = vsel %vm1171, %v1170, %v1137
    %vm1174 = vcmask 326656
    %v1175 = vsel %vm1174, %v1172, %v1143
    %v1176 = vsel %vm1174, %v1173, %v1145
    %vm1177 = vcmask 392192
    %v1178 = vsel %vm1177, %v1175, %v1151
    %v1179 = vsel %vm1177, %v1176, %v1153
    %vm1180 = vcmask 457728
    %v1181 = vsel %vm1180, %v1178, %v1159
    %v1182 = vsel %vm1180, %v1179, %v1161
    %v1183 = vld [vmem:[#allocation7] sm:$0xff]
    %v1184 = vld [vmem:[#allocation7 + $0x8] sm:$0xff]
    %v1185 = vld [vmem:[#allocation7 + $0x10] sm:$0xff]
    %v1186 = vld [vmem:[#allocation7 + $0x18] sm:$0xff]
    %v1187 = vld [vmem:[#allocation7 + $0x20] sm:$0xff]
    %v1188 = vld [vmem:[#allocation7 + $0x28] sm:$0xff]
    %v1189 = vld [vmem:[#allocation7 + $0x30] sm:$0xff]
    %v1190 = vld [vmem:[#allocation7 + $0x38] sm:$0xff]
    %v1191 = vld [vmem:[%s3] sm:$0x1]
    %v1193 = vperm.slane %v1191, 0
    %v1196 = vsel %vm83, %v1181, 0
    %v1199 = vsel %vm83, %v1182, 0
    %1201 = vmatpush.msra.mxu0 0.0
    %1202 = vmatpush.msra.mxu0 0.0
    %1203 = vmatpush.msra.mxu0 0.0
    %1204 = vmatpush.msra.mxu0 0.0
    %1205 = vmatpush.msra.mxu0 0.0
    %1206 = vmatpush.msra.mxu0 0.0
    %1207 = vmatpush.msra.mxu0 0.0
    %1208 = vmatpush.msra.mxu0 0.0
    %1209 = vmatpush.msra.mxu0 %v1190
    %1210 = vmatpush.msra.mxu0 %v1189
    %1211 = vmatpush.msra.mxu0 %v1188
    %1212 = vmatpush.msra.mxu0 %v1187
    %1213 = vmatpush.msra.mxu0 %v1186
    %1214 = vmatpush.msra.mxu0 %v1185
    %1215 = vmatpush.msra.mxu0 %v1184
    %1216 = vmatpush.msra.mxu0 %v1183
    %1217 = vmatmul.f32.gmra.mxu0 %v1196
    %v1218 = vpop.f32.mrf.mxu0
    %v1219 = vadd.f32 %v1193, %v1218
    %1220 = vmatmul.f32.gmra.mxu0 %v1199
    %v1221 = vpop.f32.mrf.mxu0
    %v1222 = vadd.f32 %v1193, %v1221
    %1223 = vdwg.mxu0
    %1224 = vst.msk [vmem:[#allocation8] sm:$0xff] %vm83, %v1219
    %1225 = vst.msk [vmem:[#allocation8 + $0x8] sm:$0xff] %vm83, %v1222
    // Predicated region
    $region30: #{tpu_custom_call.1} parent=1 // pred_check
      _
    $region31: #{tpu_custom_call.1} parent=1 // pred_check_branch
      %1227 = sbr.rel (0) target = $region33
    $region32: #{tpu_custom_call.1} parent=1 // pred_region
      %1229 = vsyncadd [#allocation4], 0
      %s1230 = sshll.u32 [#allocation8], 4
      %s1231 = int_to_ptr.vmem [resolvable:$true] %s1230
      %s1232 = sshll.u32 %s4, 4
      %s1233 = int_to_ptr.hbm [resolvable:$true] %s1232
      %1238 = dma.vmem_to_hbm [thread:$0]  %s1231, 256, %s1233, [#allocation4], 128, 128, 8
    $region33: #{tpu_custom_call.1} parent=1 // pred_fallthru
      _
    // Predicated region
    $region34: #{tpu_custom_call.1} parent=1 // pred_check
      _
    $region35: #{tpu_custom_call.1} parent=1 // pred_check_branch
      %1240 = sbr.rel (0) target = $region37
    $region36: #{tpu_custom_call.1} parent=1 // pred_region
      %1242 = dma.done [#allocation4], 256
    $region37: #{tpu_custom_call.1} parent=1 // pred_fallthru
      _
    %1243 = vsyncpa [#allocation3], 1
    %1244 = vsyncpa [#allocation6], 1
    %1245 = vsyncpa [#allocation4], 1

</llo_original>
